<compile_context>
chip_gen: v7x
topology: tpu7x:2x2x1
jax: 0.10.0
libtpu: 0.0.40
codegen_flags: <defaults>
</compile_context>

<pallas_src>
import functools

import jax
import jax.numpy as jnp
from jax.experimental import pallas as pl
from jax.experimental.pallas import tpu as pltpu


def _round_up(x, m):
    return ((x + m - 1) // m) * m


def _poly_envelope_kernel(d_ref, o_ref, *, p, a, b, c):
    """Elementwise polynomial envelope on one VMEM block (pure VPU).

    Edge cases (both benign):
      * d >= 1 may make `env` huge/inf, but that branch is discarded by the
        select, which does not propagate the untaken side.
      * Garbage in the padding region of a ragged final block is computed but
        never stored (Pallas masks out-of-bounds writes).
    """
    d = d_ref[...]

    # d^p via exponentiation by squaring (p is a small static positive int).
    # Associates differently from d**p; difference is ULP-level.
    dp = None
    base = d
    e = p
    while e > 0:
        if e & 1:
            dp = base if dp is None else dp * base
        e >>= 1
        if e:
            base = base * base

    # Horner form for the tail: env = 1 + d^p * (a + d*(b + c*d))
    env = 1.0 + dp * (a + d * (b + c * d))
    o_ref[...] = jnp.where(d < 1.0, env, jnp.zeros_like(d))


def _coeffs(exponent):
    p = int(exponent)
    a = -(p + 1) * (p + 2) / 2.0
    b = float(p * (p + 2))
    c = -p * (p + 1) / 2.0
    return p, a, b, c


def _poly_envelope_jnp(d, p, a, b, c):
    env = 1.0 + a * d**p + b * d ** (p + 1) + c * d ** (p + 2)
    return jnp.where(d < 1.0, env, jnp.zeros_like(d))


def _vmem_capacity_bytes():
    """Best-effort query of per-core VMEM; conservative (v7x) fallback."""
    try:
        info = pltpu.get_tpu_info()
        cap = getattr(info, "vmem_capacity_bytes", None)
        if cap:
            return int(cap)
    except Exception:
        pass
    return 64 << 20


def polynomial_envelope(d_scaled, exponent, *, min_pallas_bytes=256 * 1024):
    """Pallas implementation of PolynomialEnvelope(exponent).forward(d_scaled).

    Accepts an arbitrarily-shaped float array of scaled distances.
    """
    assert exponent > 0
    p, a, b, c = _coeffs(exponent)

    orig_shape = d_scaled.shape
    dtype = d_scaled.dtype
    n = int(d_scaled.size)
    itemsize = jnp.dtype(dtype).itemsize

    # Tiny inputs: a fused XLA elementwise op beats the kernel-launch fixed cost.
    if n == 0 or n * itemsize < min_pallas_bytes:
        return _poly_envelope_jnp(d_scaled, p, a, b, c)

    # Chip-generation-aware block size / scoped-VMEM limit.  The pipelined
    # in+out working set is ~4x the block (double-buffered input and output).
    if _vmem_capacity_bytes() >= (128 << 20):   # v5e / v6e: 128 MiB VMEM
        block_bytes, vmem_limit = 8 << 20, 64 << 20
    else:                                        # v7x: 64 MiB VMEM per TC
        block_bytes, vmem_limit = 4 << 20, 32 << 20

    sub_unit = max(1, 32 // itemsize)            # 8 rows for f32, 16 for bf16
    kernel = functools.partial(_poly_envelope_kernel, p=p, a=a, b=b, c=c)
    cost = pl.CostEstimate(flops=12 * n, transcendentals=0,
                           bytes_accessed=2 * n * itemsize)
    params = pltpu.CompilerParams(dimension_semantics=("parallel",),
                                  vmem_limit_bytes=vmem_limit)

    # Widest 128-multiple lane width that divides n exactly -> free 2-D view
    # (lane-dense unmasked stores), otherwise flat 1-D with a ragged tail.
    lane_w = next((w for w in (2048, 1024, 512, 256, 128) if n % w == 0), None)

    flat = d_scaled.reshape(-1)                  # free for contiguous inputs

    if lane_w is not None:
        # ---- 2-D path: (rows, lane_w) view, row-blocked grid ---------------
        rows = n // lane_w
        tr_target = max(sub_unit, block_bytes // (lane_w * itemsize))
        if rows < 2 * sub_unit:
            tr = rows                            # single full-rows block
        else:
            # At least 2 row-blocks so v7x can use both TensorCores.
            tr = min(tr_target, _round_up(pl.cdiv(rows, 2), sub_unit))
        x = flat.reshape(rows, lane_w)
        grid = (pl.cdiv(rows, tr),)
        block = (tr, lane_w)
        index_map = lambda i: (i, 0)
    else:
        # ---- 1-D path: flat array, ragged final block masked by Pallas -----
        unit = sub_unit * 128                    # 1024 elems f32, 2048 bf16
        chunk_target = max(unit, block_bytes // itemsize)
        if n < 2 * unit:
            chunk = n                            # single full-length block
        else:
            chunk = min(chunk_target, _round_up(pl.cdiv(n, 2), unit))
        x = flat
        grid = (pl.cdiv(n, chunk),)
        block = (chunk,)
        index_map = lambda i: (i,)

    out = pl.pallas_call(
        kernel,
        out_shape=jax.ShapeDtypeStruct(x.shape, dtype),
        grid=grid,
        in_specs=[pl.BlockSpec(block, index_map)],
        out_specs=pl.BlockSpec(block, index_map),
        compiler_params=params,
        cost_estimate=cost,
    )(x)

    return out.reshape(orig_shape)


def polynomial_envelope_ref(d_scaled, exponent):
    """Pure-JAX reference (mirrors the PyTorch forward exactly)."""
    p, a, b, c = _coeffs(exponent)
    return _poly_envelope_jnp(d_scaled, p, a, b, c)


if __name__ == "__main__":
    key = jax.random.PRNGKey(0)
    exponent = 5  # static "parameter" of the module
    k1, k2, k3, k4 = jax.random.split(key, 4)

    cases = []

    # 1) Small, module-like shape; force the Pallas path (2-D view, n % 2048 == 0).
    x1 = jax.random.uniform(k1, (2, 4, 16, 16), jnp.float32, 0.0, 1.5)
    cases.append((polynomial_envelope(x1, exponent, min_pallas_bytes=0), x1))

    # 2) Medium, lane-divisible: 2-D path with a 2-step "parallel" grid.
    x2 = jax.random.uniform(k2, (96, 4096), jnp.float32, 0.0, 1.5)
    cases.append((polynomial_envelope(x2, exponent), x2))

    # 3) Medium, NOT divisible by 128: flat 1-D path with a ragged masked tail.
    x3 = jax.random.uniform(k3, (257, 515), jnp.float32, 0.0, 1.5)
    cases.append((polynomial_envelope(x3, exponent), x3))

    # 4) Tiny input: pure-jnp fallback path.
    x4 = jax.random.uniform(k4, (3, 5), jnp.float32, 0.0, 1.5)
    cases.append((polynomial_envelope(x4, exponent), x4))

    for out, x in cases:
        out = jax.block_until_ready(out)
        ref = polynomial_envelope_ref(x, exponent)
        assert out.shape == x.shape and out.dtype == x.dtype
        err = float(jnp.max(jnp.abs(out - ref)))
        assert err < 1e-5, err

    print("KERNEL_OK")
</pallas_src>

<mosaic_0001>
module attributes {stable_mosaic.version = 11 : i64} {
  func.func @_poly_envelope_kernel(%arg0: i32, %arg1: memref<1x2048xf32, #tpu.memory_space<vmem>>, %arg2: memref<1x2048xf32, #tpu.memory_space<vmem>>) attributes {dimension_semantics = [#tpu.dimension_semantics<parallel>], iteration_bounds = array<i64: 1>, scalar_prefetch = 0 : i64, scratch_operands = 0 : i64, tpu.core_type = #tpu.core_type<tc>, window_params = [{transform_indices = @transform_0, window_bounds = array<i64: 1, 2048>}, {transform_indices = @transform_1, window_bounds = array<i64: 1, 2048>}]} {
    %c0 = arith.constant 0 : index
    %c0_0 = arith.constant 0 : index
    %0 = vector.load %arg1[%c0, %c0_0] : memref<1x2048xf32, #tpu.memory_space<vmem>>, vector<1x2048xf32>
    %1 = arith.mulf %0, %0 : vector<1x2048xf32>
    %2 = arith.mulf %1, %1 : vector<1x2048xf32>
    %3 = arith.mulf %0, %2 : vector<1x2048xf32>
    %cst = arith.constant -1.500000e+01 : f32
    %4 = vector.broadcast %cst : f32 to vector<1x2048xf32>
    %5 = arith.mulf %4, %0 : vector<1x2048xf32>
    %cst_1 = arith.constant 3.500000e+01 : f32
    %6 = vector.broadcast %cst_1 : f32 to vector<1x2048xf32>
    %7 = arith.addf %6, %5 : vector<1x2048xf32>
    %8 = arith.mulf %0, %7 : vector<1x2048xf32>
    %cst_2 = arith.constant -2.100000e+01 : f32
    %9 = vector.broadcast %cst_2 : f32 to vector<1x2048xf32>
    %10 = arith.addf %9, %8 : vector<1x2048xf32>
    %11 = arith.mulf %3, %10 : vector<1x2048xf32>
    %cst_3 = arith.constant 1.000000e+00 : f32
    %12 = vector.broadcast %cst_3 : f32 to vector<1x2048xf32>
    %13 = arith.addf %12, %11 : vector<1x2048xf32>
    %cst_4 = arith.constant 1.000000e+00 : f32
    %14 = vector.broadcast %cst_4 : f32 to vector<1x2048xf32>
    %15 = arith.cmpf olt, %0, %14 : vector<1x2048xf32>
    %cst_5 = arith.constant 0.000000e+00 : f32
    %16 = vector.broadcast %cst_5 : f32 to vector<1x2048xf32>
    %17 = arith.select %15, %13, %16 : vector<1x2048xi1>, vector<1x2048xf32>
    %c0_6 = arith.constant 0 : index
    %c0_7 = arith.constant 0 : index
    %18 = vector.load %arg2[%c0_6, %c0_7] : memref<1x2048xf32, #tpu.memory_space<vmem>>, vector<1x2048xf32>
    tpu.vector_store %arg2[%c0_6, %c0_7], %17 {strides = array<i32>} : memref<1x2048xf32, #tpu.memory_space<vmem>>, vector<1x2048xf32>,
    return
  }
  func.func @transform_0(%arg0: i32) -> (i32, i32) {
    %c0_i32 = arith.constant 0 : i32
    %c0_i32_0 = arith.constant 0 : i32
    return %arg0, %c0_i32 : i32, i32
  }
  func.func @transform_1(%arg0: i32) -> (i32, i32) {
    %c0_i32 = arith.constant 0 : i32
    %c0_i32_0 = arith.constant 0 : i32
    return %arg0, %c0_i32 : i32, i32
  }
}

</mosaic_0001>

<llo_original>
// kernel: tpu_custom_call.1
$region0: #{tpu_custom_call.1}
  #allocation0 [shape = 'u32[]', space=smem, size = 0x4, offset = 0x4, fixed_abs, tag = 'smem constant byte address 0x4 - core index']
  #allocation1 [shape = 'u32[144,128]{1,0:T(1,128)}', space=vmem, size = 0x12000, scoped, tag = 'internal scratch']
  %s0 = inlined_call_operand.hbm [shape: f32[1,2048], index: 0, kind: input, shape index: {}]
  %s1 = inlined_call_operand.hbm [shape: f32[1,2048], index: 1, kind: output, shape index: {}]
  %s2 = sld [smem:[#allocation0]]
  $region18: #{tpu_custom_call.1} parent=0
    _
  %s4 = ssub.s32 1, %s2
  %s5 = scalar_select 0, %s4, %s2
  $region1: #{tpu_custom_call.1} parent=0
    #allocation2 [shape = 'u8[8192]{0}', space=vmem, size = 0x2000, scoped, tag = 'input window, operand 0, single buffered']
    #allocation3 [shape = 's32[1]{0}', space=sflag, size = 0x4, scoped, tag = 'scoped memory for tpu_custom_call.1']
    #allocation4 [shape = 's32[1]{0}', space=sflag, size = 0x4, scoped, tag = 'scoped memory for tpu_custom_call.1']
    #allocation5 [shape = 'u8[8192]{0}', space=vmem, size = 0x2000, scoped, tag = 'output window, operand 0, single buffered']
    %6 = vsyncpa [#allocation3], 0
    %7 = vsyncpa [#allocation4], 0
    // Predicated region
    $region2: #{tpu_custom_call.1} parent=1 // pred_check
      _
    $region3: #{tpu_custom_call.1} parent=1 // pred_check_branch
      %9 = sbr.rel (0) target = $region5
    $region4: #{tpu_custom_call.1} parent=1 // pred_region
      %s11 = ssub.s32 256, 256
      %12 = vsyncadd [#allocation3], %s11
      %s14 = sshll.u32 [#allocation2], 4
      %s15 = int_to_ptr.vmem [resolvable:$true] %s14
      %17 = dma.hbm_to_vmem [thread:$0]  %s0, 256, %s15, [#allocation3]
    $region5: #{tpu_custom_call.1} parent=1 // pred_fallthru
      _
    // Predicated region
    $region6: #{tpu_custom_call.1} parent=1 // pred_check
      _
    $region7: #{tpu_custom_call.1} parent=1 // pred_check_branch
      %19 = sbr.rel (0) target = $region9
    $region8: #{tpu_custom_call.1} parent=1 // pred_region
      %20 = dma.done [#allocation3], 256
    $region9: #{tpu_custom_call.1} parent=1 // pred_fallthru
      _
    %v21 = vld [vmem:[#allocation2] sm:$0xff]
    %v22 = vld [vmem:[#allocation2 + $0x8] sm:$0xff]
    %v23 = vmul.f32 %v21, %v21
    %v24 = vmul.f32 %v22, %v22
    %v25 = vmul.f32 %v23, %v23
    %v26 = vmul.f32 %v24, %v24
    %v27 = vmul.f32 %v21, %v25
    %v28 = vmul.f32 %v22, %v26
    %v29 = vmul.f32 %v21, -15.0
    %v30 = vmul.f32 %v22, -15.0
    %v31 = vadd.f32 %v29, 35.0
    %v32 = vadd.f32 %v30, 35.0
    %v33 = vmul.f32 %v21, %v31
    %v34 = vmul.f32 %v22, %v32
    %v35 = vadd.f32 %v33, -21.0
    %v36 = vadd.f32 %v34, -21.0
    %v37 = vmul.f32 %v27, %v35
    %v38 = vmul.f32 %v28, %v36
    %v39 = vadd.f32 %v37, 1.0
    %v40 = vadd.f32 %v38, 1.0
    %vm41 = vcmp.lt.f32.partialorder %v21, 1.0
    %vm42 = vcmp.lt.f32.partialorder %v22, 1.0
    %v43 = vsel %vm41, %v39, 0.0
    %v44 = vsel %vm42, %v40, 0.0
    %45 = vst [vmem:[#allocation5] sm:$0xff] %v43
    %46 = vst [vmem:[#allocation5 + $0x8] sm:$0xff] %v44
    // Predicated region
    $region10: #{tpu_custom_call.1} parent=1 // pred_check
      _
    $region11: #{tpu_custom_call.1} parent=1 // pred_check_branch
      %48 = sbr.rel (0) target = $region13
    $region12: #{tpu_custom_call.1} parent=1 // pred_region
      %s50 = ssub.s32 256, 256
      %51 = vsyncadd [#allocation4], %s50
      %s53 = sshll.u32 [#allocation5], 4
      %s54 = int_to_ptr.vmem [resolvable:$true] %s53
      %56 = dma.vmem_to_hbm [thread:$0]  %s54, 256, %s1, [#allocation4]
    $region13: #{tpu_custom_call.1} parent=1 // pred_fallthru
      _
    // Predicated region
    $region14: #{tpu_custom_call.1} parent=1 // pred_check
      _
    $region15: #{tpu_custom_call.1} parent=1 // pred_check_branch
      %58 = sbr.rel (0) target = $region17
    $region16: #{tpu_custom_call.1} parent=1 // pred_region
      %59 = dma.done [#allocation4], 256
    $region17: #{tpu_custom_call.1} parent=1 // pred_fallthru
      _
    %60 = vsyncpa [#allocation3], 1
    %61 = vsyncpa [#allocation4], 1

</llo_original>
